<compile_context>
chip_gen: v7x
topology: tpu7x:2x2x1
jax: 0.10.0
libtpu: 0.0.40
codegen_flags: <defaults>
</compile_context>

<pallas_src>
import functools

import jax
import jax.numpy as jnp
from jax.experimental import pallas as pl
from jax.experimental.pallas import tpu as pltpu

_LN_EPS = 1e-5  # torch.nn.LayerNorm default


def _round_up(x, m):
    return (x + m - 1) // m * m


def _classifier_kernel(x_ref, w_ref, b_ref, o_ref, *,
                       use_layernorm: bool, mxu_dtype, out_rows: int):
    """Fused (optional LayerNorm) + 1x1-conv-as-matmul + bias, channel-major output.

    x_ref: (1, TN, C)         token tile (input dtype)
    w_ref: (C, OUT_LANE)      conv weight, pre-transposed / zero-padded / pre-cast
    b_ref: (OUT_SUB, 1)       conv bias (f32), padded to sublane multiple
    o_ref: (1, OUT_SUB, TN)   logits tile, channels on sublanes, tokens on lanes
    """
    x = x_ref[0]                                     # (TN, C)

    if use_layernorm:
        # One-pass LayerNorm: f32 accumulation, var = E[x^2] - mean^2, and the
        # (x - mean) * rsqrt(var + eps) is fused with the MXU-operand cast so no
        # tile-sized `centered` temporary is materialized.
        xf = x.astype(jnp.float32)
        mean = jnp.mean(xf, axis=-1, keepdims=True)
        mean_sq = jnp.mean(xf * xf, axis=-1, keepdims=True)
        var = jnp.maximum(mean_sq - mean * mean, 0.0)   # guard f32 cancellation
        x = ((xf - mean) * jax.lax.rsqrt(var + _LN_EPS)).astype(mxu_dtype)
    else:
        x = x.astype(mxu_dtype)

    # (TN, C) @ (C, OUT_LANE) -> f32 accumulate on the MXU.
    y = jnp.dot(x, w_ref[...], preferred_element_type=jnp.float32)   # (TN, OUT_LANE)

    # Slice off the zero-padded columns BEFORE the XLU transpose (less transpose
    # traffic / vreg pressure for small class counts).
    y = y[:, :out_rows]                              # (TN, OUT_SUB)
    o_ref[0] = (y.T + b_ref[...]).astype(o_ref.dtype)   # (OUT_SUB, TN) + (OUT_SUB, 1)


def linear_classifier_forward(embeddings, weight, bias, *, tokenH, tokenW,
                              normalize=None, mxu_dtype=None, out_dtype=None,
                              target_grid_steps=8):
    """JAX/Pallas equivalent of LinearClassifier.forward.

    embeddings: (B, tokenH*tokenW, C)   (any shape reshapable to (-1, H*W, C))
    weight:     (output_dim, C, 1, 1)   (torch Conv2d layout)
    bias:       (output_dim,)
    returns:    (B, output_dim, tokenH, tokenW)   (NCHW, like the PyTorch module)

    mxu_dtype=None: matmul operands use the embeddings dtype (bf16 embeddings are
    consumed directly; LayerNorm statistics are always accumulated in f32).
    out_dtype=None: output dtype follows the embeddings dtype (PyTorch behavior).
    """
    if normalize not in (None, "layernorm"):
        # TODO(synk): batchnorm (training-mode batch statistics over N,H,W per channel)
        # needs a cross-tile reduction pass; not implemented here.
        raise NotImplementedError("only normalize in {None, 'layernorm'} supported")

    out_dim, in_channels = int(weight.shape[0]), int(weight.shape[1])
    hw = int(tokenH) * int(tokenW)

    x = embeddings.reshape(-1, hw, in_channels)      # (B, HW, C), metadata only
    batch = x.shape[0]

    if mxu_dtype is None:
        mxu_dtype = embeddings.dtype
    if out_dtype is None:
        out_dtype = embeddings.dtype
    x_itemsize = jnp.dtype(embeddings.dtype).itemsize

    # --- token-tile selection -------------------------------------------------
    #  (a) enough grid steps (batch * n_tiles >= ~target_grid_steps) so the
    #      BlockSpec pipeline overlaps DMA with compute and v7x's 2 TCs have work,
    #  (b) raw x tile capped at ~6 MiB so double-buffering + f32 LN temporaries
    #      stay inside the 40 MiB scoped-VMEM budget even on v7x (64 MiB physical),
    #  (c) >= 256 rows (measured: 512-row tiles already ~85% of HBM roofline),
    #  (d) no wrapper-side padding of hw: ragged last tile via pl.cdiv grid.
    if hw < 256:
        tile_n = hw                                  # tiny grids: one full-extent tile
    else:
        tiles_wanted = max(1, pl.cdiv(int(target_grid_steps), max(1, batch)))
        tile_n = _round_up(pl.cdiv(hw, tiles_wanted), 128)
        tile_n = max(tile_n, 256)
        max_rows = max(128, ((6 << 20) // max(1, in_channels * x_itemsize)) // 128 * 128)
        tile_n = min(tile_n, max_rows, (hw // 128) * 128)
        tile_n = max(tile_n, 128)
    n_tiles = pl.cdiv(hw, tile_n)

    out_lane = _round_up(out_dim, 128)   # matmul width (free on the MXU)
    out_sub = _round_up(out_dim, 8)      # stored channel rows (sublane multiple)

    # Pre-transpose / pad / cast the conv weight ONCE in the wrapper (it is tiny).
    w2 = weight.reshape(out_dim, in_channels).T.astype(mxu_dtype)     # (C, OUT)
    w2 = jnp.pad(w2, ((0, 0), (0, out_lane - out_dim)))               # (C, OUT_LANE)
    b2 = jnp.pad(bias.astype(jnp.float32), (0, out_sub - out_dim))
    b2 = b2.reshape(out_sub, 1)                                       # (OUT_SUB, 1)

    kernel = functools.partial(
        _classifier_kernel,
        use_layernorm=(normalize == "layernorm"),
        mxu_dtype=jnp.dtype(mxu_dtype),
        out_rows=out_sub)

    out = pl.pallas_call(
        kernel,
        out_shape=jax.ShapeDtypeStruct((batch, out_sub, hw), out_dtype),
        grid_spec=pltpu.PrefetchScalarGridSpec(
            num_scalar_prefetch=0,
            grid=(batch, n_tiles),
            in_specs=[
                # streamed token tile; weight/bias are grid-resident (constant index,
                # never re-DMA'd after the first step).
                pl.BlockSpec((1, tile_n, in_channels), lambda b, i: (b, i, 0)),
                pl.BlockSpec((in_channels, out_lane), lambda b, i: (0, 0)),
                pl.BlockSpec((out_sub, 1), lambda b, i: (0, 0)),
            ],
            # channel-major, lane-dense output tile (tokens on the lane axis)
            out_specs=pl.BlockSpec((1, out_sub, tile_n), lambda b, i: (b, 0, i)),
        ),
        compiler_params=pltpu.CompilerParams(
            dimension_semantics=("parallel", "parallel"),
            vmem_limit_bytes=40 * 1024 * 1024,   # v7x-safe (64 MiB physical VMEM)
        ),
    )(x, w2, b2)

    # Output is already channel-major; drop padded channels and reshape
    # (metadata only) -> NCHW like the PyTorch module.
    return out[:, :out_dim, :].reshape(batch, out_dim, tokenH, tokenW)


def _reference_forward(embeddings, weight, bias, *, tokenH, tokenW, normalize):
    """Plain-JAX reference mirroring the PyTorch module (f32 throughout)."""
    C = weight.shape[1]
    x = embeddings
    if normalize == "layernorm":
        mean = jnp.mean(x, axis=-1, keepdims=True)
        var = jnp.mean((x - mean) ** 2, axis=-1, keepdims=True)
        x = (x - mean) / jnp.sqrt(var + _LN_EPS)
    x = x.reshape(-1, tokenH, tokenW, C)             # (B, H, W, C)
    x = jnp.transpose(x, (0, 3, 1, 2))               # (B, C, H, W)
    w2 = weight.reshape(weight.shape[0], C)          # (OUT, C)
    out = jnp.einsum("bchw,oc->bohw", x, w2) + bias[None, :, None, None]
    return out


if __name__ == "__main__":
    # Small, deterministic example consistent with the module:
    # in_channels=32, tokenH=tokenW=16, output_dim=8, batch=2.
    in_channels = 32
    tokenH = tokenW = 16
    output_dim = 8
    batch = 2

    key = jax.random.PRNGKey(0)
    k_x, k_w, k_b = jax.random.split(key, 3)

    embeddings = jax.random.normal(
        k_x, (batch, tokenH * tokenW, in_channels), dtype=jnp.float32)
    weight = 0.1 * jax.random.normal(
        k_w, (output_dim, in_channels, 1, 1), dtype=jnp.float32)
    bias = 0.1 * jax.random.normal(k_b, (output_dim,), dtype=jnp.float32)

    # LayerNorm path (f32 MXU operands: portable and exact).
    ref_ln = _reference_forward(
        embeddings, weight, bias,
        tokenH=tokenH, tokenW=tokenW, normalize="layernorm")
    out_ln = linear_classifier_forward(
        embeddings, weight, bias,
        tokenH=tokenH, tokenW=tokenW, normalize="layernorm")
    out_ln = jax.block_until_ready(out_ln)
    assert out_ln.shape == (batch, output_dim, tokenH, tokenW), out_ln.shape
    assert jnp.allclose(out_ln, ref_ln, atol=1e-4, rtol=1e-4), float(
        jnp.max(jnp.abs(out_ln - ref_ln)))

    # Identity (no-normalization) path.
    ref_id = _reference_forward(
        embeddings, weight, bias,
        tokenH=tokenH, tokenW=tokenW, normalize=None)
    out_id = linear_classifier_forward(
        embeddings, weight, bias,
        tokenH=tokenH, tokenW=tokenW, normalize=None)
    out_id = jax.block_until_ready(out_id)
    assert out_id.shape == (batch, output_dim, tokenH, tokenW), out_id.shape
    assert jnp.allclose(out_id, ref_id, atol=1e-4, rtol=1e-4), float(
        jnp.max(jnp.abs(out_id - ref_id)))

    # NOTE: on real TPU hardware, pass mxu_dtype=jnp.bfloat16 (or feed bf16
    # embeddings directly) for the production perf path; not exercised here because
    # the test backend does not support BF16xBF16=F32 dots.
    print("KERNEL_OK")
</pallas_src>

<mosaic_0001>
module attributes {stable_mosaic.version = 11 : i64} {
  func.func @_classifier_kernel(%arg0: i32, %arg1: i32, %arg2: memref<1x256x32xf32, #tpu.memory_space<vmem>>, %arg3: memref<32x128xf32, #tpu.memory_space<vmem>>, %arg4: memref<8x1xf32, #tpu.memory_space<vmem>>, %arg5: memref<1x8x256xf32, #tpu.memory_space<vmem>>) attributes {dimension_semantics = [#tpu.dimension_semantics<parallel>, #tpu.dimension_semantics<parallel>], iteration_bounds = array<i64: 2, 1>, scalar_prefetch = 0 : i64, scratch_operands = 0 : i64, tpu.core_type = #tpu.core_type<tc>, window_params = [{transform_indices = @transform_0, window_bounds = array<i64: 1, 256, 32>}, {pipeline_mode = #tpu.pipeline_mode<synchronous>, transform_indices = @transform_1, window_bounds = array<i64: 32, 128>}, {pipeline_mode = #tpu.pipeline_mode<synchronous>, transform_indices = @transform_2, window_bounds = array<i64: 8, 1>}, {transform_indices = @transform_3, window_bounds = array<i64: 1, 8, 256>}]} {
    %c0 = arith.constant 0 : index
    %c0_0 = arith.constant 0 : index
    %c0_1 = arith.constant 0 : index
    %0 = vector.load %arg2[%c0, %c0_0, %c0_1] : memref<1x256x32xf32, #tpu.memory_space<vmem>>, vector<1x256x32xf32>
    %1 = vector.shape_cast %0 : vector<1x256x32xf32> to vector<256x32xf32>
    %cst = arith.constant dense<0.000000e+00> : vector<256xf32>
    %2 = vector.multi_reduction <add>, %1, %cst [1] : vector<256x32xf32> to vector<256xf32>
    %3 = vector.shape_cast %2 : vector<256xf32> to vector<256x1xf32>
    %cst_2 = arith.constant 3.200000e+01 : f32
    %4 = vector.broadcast %cst_2 : f32 to vector<256x1xf32>
    %5 = arith.divf %3, %4 : vector<256x1xf32>
    %6 = arith.mulf %1, %1 : vector<256x32xf32>
    %cst_3 = arith.constant dense<0.000000e+00> : vector<256xf32>
    %7 = vector.multi_reduction <add>, %6, %cst_3 [1] : vector<256x32xf32> to vector<256xf32>
    %8 = vector.shape_cast %7 : vector<256xf32> to vector<256x1xf32>
    %cst_4 = arith.constant 3.200000e+01 : f32
    %9 = vector.broadcast %cst_4 : f32 to vector<256x1xf32>
    %10 = arith.divf %8, %9 : vector<256x1xf32>
    %11 = arith.mulf %5, %5 : vector<256x1xf32>
    %12 = arith.subf %10, %11 : vector<256x1xf32>
    %cst_5 = arith.constant 0.000000e+00 : f32
    %13 = vector.broadcast %cst_5 : f32 to vector<256x1xf32>
    %14 = arith.maximumf %12, %13 : vector<256x1xf32>
    %15 = vector.broadcast %5 : vector<256x1xf32> to vector<256x32xf32>
    %16 = arith.subf %1, %15 : vector<256x32xf32>
    %cst_6 = arith.constant 9.99999974E-6 : f32
    %17 = vector.broadcast %cst_6 : f32 to vector<256x1xf32>
    %18 = arith.addf %14, %17 : vector<256x1xf32>
    %19 = math.rsqrt %18 : vector<256x1xf32>
    %20 = vector.broadcast %19 : vector<256x1xf32> to vector<256x32xf32>
    %21 = arith.mulf %16, %20 : vector<256x32xf32>
    %c0_7 = arith.constant 0 : index
    %c0_8 = arith.constant 0 : index
    %22 = vector.load %arg3[%c0_7, %c0_8] : memref<32x128xf32, #tpu.memory_space<vmem>>, vector<32x128xf32>
    %cst_9 = arith.constant dense<0.000000e+00> : vector<256x128xf32>
    %23 = tpu.matmul %21, %22, %cst_9 {dimension_numbers = #tpu.dot_dimension_numbers<[1], [0], [0], [1], [0, 0, 1, 1], [], []>} : vector<256x32xf32>, vector<32x128xf32>, vector<256x128xf32> -> vector<256x128xf32>
    %24 = vector.extract_strided_slice %23 {offsets = [0, 0], sizes = [256, 8], strides = [1, 1]} : vector<256x128xf32> to vector<256x8xf32>
    %25 = tpu.transpose %24, [1, 0] : vector<256x8xf32> -> vector<8x256xf32>
    %c0_10 = arith.constant 0 : index
    %c0_11 = arith.constant 0 : index
    %26 = vector.load %arg4[%c0_10, %c0_11] : memref<8x1xf32, #tpu.memory_space<vmem>>, vector<8x1xf32>
    %27 = vector.broadcast %26 : vector<8x1xf32> to vector<8x256xf32>
    %28 = arith.addf %25, %27 : vector<8x256xf32>
    %c0_12 = arith.constant 0 : index
    %c0_13 = arith.constant 0 : index
    %c0_14 = arith.constant 0 : index
    %29 = vector.load %arg5[%c0_12, %c0_13, %c0_14] : memref<1x8x256xf32, #tpu.memory_space<vmem>>, vector<1x8x256xf32>
    %30 = vector.shape_cast %29 : vector<1x8x256xf32> to vector<8x256xf32>
    %31 = vector.shape_cast %28 : vector<8x256xf32> to vector<1x8x256xf32>
    tpu.vector_store %arg5[%c0_12, %c0_13, %c0_14], %31 {strides = array<i32>} : memref<1x8x256xf32, #tpu.memory_space<vmem>>, vector<1x8x256xf32>,
    return
  }
  func.func @transform_0(%arg0: i32, %arg1: i32) -> (i32, i32, i32) {
    %c0_i32 = arith.constant 0 : i32
    %c0_i32_0 = arith.constant 0 : i32
    return %arg0, %arg1, %c0_i32 : i32, i32, i32
  }
  func.func @transform_1(%arg0: i32, %arg1: i32) -> (i32, i32) {
    %c0_i32 = arith.constant 0 : i32
    %c0_i32_0 = arith.constant 0 : i32
    %c0_i32_1 = arith.constant 0 : i32
    return %c0_i32, %c0_i32_0 : i32, i32
  }
  func.func @transform_2(%arg0: i32, %arg1: i32) -> (i32, i32) {
    %c0_i32 = arith.constant 0 : i32
    %c0_i32_0 = arith.constant 0 : i32
    %c0_i32_1 = arith.constant 0 : i32
    return %c0_i32, %c0_i32_0 : i32, i32
  }
  func.func @transform_3(%arg0: i32, %arg1: i32) -> (i32, i32, i32) {
    %c0_i32 = arith.constant 0 : i32
    %c0_i32_0 = arith.constant 0 : i32
    return %arg0, %c0_i32, %arg1 : i32, i32, i32
  }
}

</mosaic_0001>

<llo_original>
// kernel: tpu_custom_call.1
$region0: #{tpu_custom_call.1}
  #allocation0 [shape = 'u32[]', space=smem, size = 0x4, offset = 0x4, fixed_abs, tag = 'smem constant byte address 0x4 - core index']
  #allocation1 [shape = 'u32[144,128]{1,0:T(1,128)}', space=vmem, size = 0x12000, scoped, tag = 'internal scratch']
  %s0 = inlined_call_operand.vmem [shape: f32[2,256,32], index: 0, kind: input, shape index: {}]
  %s1 = inlined_call_operand.vmem [shape: f32[32,128], index: 1, kind: input, shape index: {}]
  %s2 = inlined_call_operand.vmem [shape: f32[8,1], index: 2, kind: input, shape index: {}]
  %s3 = inlined_call_operand.hbm [shape: f32[2,8,256], index: 3, kind: output, shape index: {}]
  %s4 = sld [smem:[#allocation0]]
  $region45: #{tpu_custom_call.1} parent=0
    _
  %s6 = ssub.s32 1, %s4
  %s7 = scalar_select 0, %s6, %s4
  $region1: #{tpu_custom_call.1} parent=0
    #allocation2 [shape = 'u8[16384]{0}', space=vmem, size = 0x4000, scoped, tag = 'output window, operand 0']
    #allocation3 [shape = 's32[2]{0}', space=sflag, size = 0x8, scoped, tag = 'scoped memory for tpu_custom_call.1']
    %8 = vsyncpa [#allocation3], 0
    %s9 = scalar_lea.sflag [#allocation3], 1
    %10 = vsyncpa %s9, 0
    loop: start=0, step=1, limit=4
    $region2: #{tpu_custom_call.1} parent=1 // loop_pre_header
      _
    $region3: #{tpu_custom_call.1} parent=1 // loop_header
      %s12 = sphi 0, %s16
      %p13 = scmp.ge.s32.totalorder %s12, 4
      %s19 = sphi 0, %s31
      %s20 = sphi 0, %s27
      %s21 = sphi 0, %s19
      %s22 = sphi 0, %s20
      %s23 = sphi 0, %s21
      %s24 = sphi 0, %s22
      %s36 = sphi 0, %s38
      %s39 = sphi 0, %s36
      %s40 = sphi 0, %s39
      %s56 = sphi 0, %s40
      %s60 = sphi 0, %s60
      %s62 = sphi 0, %s60
      %s63 = sphi 0, %s62
      %s77 = sphi 0, %s63
      %s81 = sphi 0, %s81
      %s83 = sphi 0, %s81
      %s84 = sphi 0, %s83
      %s98 = sphi 0, %s84
      %s106 = sphi 0, %s108
      %s109 = sphi 0, %s106
      %s110 = sphi 0, %s109
      %s126 = sphi 0, %s110
    $region4: #{tpu_custom_call.1} parent=1 // loop_header_branch
      %15 = sbr.rel (%p13) target = $region8
    $region5: #{tpu_custom_call.1} parent=1 // loop_body
      %s17 = ssub.s32 %s12, 1
      %s18 = ssub.s32 %s12, 2
      %s25 = sadd.s32 1, %s20
      %p26 = scmp.ge.s32.totalorder %s25, 1
      %s27 = scalar_select %p26, 0, %s25
      %s28 = sadd.s32 1, %s19
      %s29 = scalar_select %p26, %s28, %s19
      %p30 = scmp.ge.s32.totalorder %s29, 2
      %s31 = scalar_select %p30, 0, %s29
      %s32 = ssub.s32 %s19, %s31
      %s33 = ssub.s32 %s20, %s27
      %s34 = sor.u32 %s32, %s33
      %p35 = scmp.eq.s32.totalorder %s34, 0
      %s37 = sadd.s32 %s36, 1
      %s38 = scalar_select %p35, %s36, %s37
      %p41 = pneg %p35
      %p42 = scmp.eq.s32.totalorder %s12, 1
      %p43 = por %p41, %p42
      %p44 = scmp.ne.s32.totalorder %s36, %s39
      %p45 = scmp.eq.s32.totalorder %s12, 0
      %p46 = por %p44, %p45
      %p47 = scmp.ne.s32.totalorder %s36, %s39
      %p48 = scmp.eq.s32.totalorder %s17, 1
      %p49 = por %p47, %p48
      %p50 = scmp.ne.s32.totalorder %s39, %s40
      %p51 = scmp.eq.s32.totalorder %s17, 0
      %p52 = por %p50, %p51
      %p53 = scmp.ne.s32.totalorder %s39, %s40
      %p54 = scmp.eq.s32.totalorder %s18, 1
      %p55 = por %p53, %p54
      %p57 = scmp.ne.s32.totalorder %s40, %s56
      %p58 = scmp.eq.s32.totalorder %s18, 0
      %p59 = por %p57, %p58
      %s61 = sadd.s32 %s60, 1
      %p64 = scmp.eq.s32.totalorder %s12, 1
      %p65 = scmp.ne.s32.totalorder %s60, %s62
      %p66 = scmp.eq.s32.totalorder %s12, 0
      %p67 = por %p65, %p66
      %p68 = scmp.ne.s32.totalorder %s60, %s62
      %p69 = scmp.eq.s32.totalorder %s17, 1
      %p70 = por %p68, %p69
      %p71 = scmp.ne.s32.totalorder %s62, %s63
      %p72 = scmp.eq.s32.totalorder %s17, 0
      %p73 = por %p71, %p72
      %p74 = scmp.ne.s32.totalorder %s62, %s63
      %p75 = scmp.eq.s32.totalorder %s18, 1
      %p76 = por %p74, %p75
      %p78 = scmp.ne.s32.totalorder %s63, %s77
      %p79 = scmp.eq.s32.totalorder %s18, 0
      %p80 = por %p78, %p79
      %s82 = sadd.s32 %s81, 1
      %p85 = scmp.eq.s32.totalorder %s12, 1
      %p86 = scmp.ne.s32.totalorder %s81, %s83
      %p87 = scmp.eq.s32.totalorder %s12, 0
      %p88 = por %p86, %p87
      %p89 = scmp.ne.s32.totalorder %s81, %s83
      %p90 = scmp.eq.s32.totalorder %s17, 1
      %p91 = por %p89, %p90
      %p92 = scmp.ne.s32.totalorder %s83, %s84
      %p93 = scmp.eq.s32.totalorder %s17, 0
      %p94 = por %p92, %p93
      %p95 = scmp.ne.s32.totalorder %s83, %s84
      %p96 = scmp.eq.s32.totalorder %s18, 1
      %p97 = por %p95, %p96
      %p99 = scmp.ne.s32.totalorder %s84, %s98
      %p100 = scmp.eq.s32.totalorder %s18, 0
      %p101 = por %p99, %p100
      %s102 = ssub.s32 %s19, %s31
      %s103 = ssub.s32 %s20, %s27
      %s104 = sor.u32 %s102, %s103
      %p105 = scmp.eq.s32.totalorder %s104, 0
      %s107 = sadd.s32 %s106, 1
      %s108 = scalar_select %p105, %s106, %s107
      %p111 = pneg %p105
      %p112 = scmp.eq.s32.totalorder %s12, 1
      %p113 = por %p111, %p112
      %p114 = scmp.ne.s32.totalorder %s106, %s109
      %p115 = scmp.eq.s32.totalorder %s12, 0
      %p116 = por %p114, %p115
      %p117 = scmp.ne.s32.totalorder %s106, %s109
      %p118 = scmp.eq.s32.totalorder %s17, 1
      %p119 = por %p117, %p118
      %p120 = scmp.ne.s32.totalorder %s109, %s110
      %p121 = scmp.eq.s32.totalorder %s17, 0
      %p122 = por %p120, %p121
      %p123 = scmp.ne.s32.totalorder %s109, %s110
      %p124 = scmp.eq.s32.totalorder %s18, 1
      %p125 = por %p123, %p124
      %p127 = scmp.ne.s32.totalorder %s110, %s126
      %p128 = scmp.eq.s32.totalorder %s18, 0
      %p129 = por %p127, %p128
      %p130 = scmp.le.s32.totalorder 1, %s12
      %p131 = scmp.lt.s32.totalorder %s12, 3
      %p132 = pnand %p130, %p131
      %p133 = pneg %p132
      // Predicated region
      $region9: #{tpu_custom_call.1} parent=5 // pred_check
        _
      $region10: #{tpu_custom_call.1} parent=5 // pred_check_branch
        %135 = sbr.rel (%p132) target = $region12
      $region11: #{tpu_custom_call.1} parent=5 // pred_region
        %s136 = ssub.s32 %s12, 1
        // Predicated region
        $region13: #{tpu_custom_call.1} parent=11 // pred_check
          %p137 = pneg %p73
        $region14: #{tpu_custom_call.1} parent=11 // pred_check_branch
          %139 = sbr.rel (%p137) target = $region16
        $region15: #{tpu_custom_call.1} parent=11 // pred_region
          _
        $region16: #{tpu_custom_call.1} parent=11 // pred_fallthru
          _
        // Predicated region
        $region17: #{tpu_custom_call.1} parent=11 // pred_check
          %p140 = pneg %p94
        $region18: #{tpu_custom_call.1} parent=11 // pred_check_branch
          %142 = sbr.rel (%p140) target = $region20
        $region19: #{tpu_custom_call.1} parent=11 // pred_region
          _
        $region20: #{tpu_custom_call.1} parent=11 // pred_fallthru
          _
      $region12: #{tpu_custom_call.1} parent=5 // pred_fallthru
        _
      %p143 = scmp.lt.s32.totalorder %s12, 2
      // Predicated region
      $region21: #{tpu_custom_call.1} parent=5 // pred_check
        %p144 = pneg %p143
      $region22: #{tpu_custom_call.1} parent=5 // pred_check_branch
        %146 = sbr.rel (%p144) target = $region24
      $region23: #{tpu_custom_call.1} parent=5 // pred_region
        // Predicated region
        $region25: #{tpu_custom_call.1} parent=23 // pred_check
          %p147 = pneg %p46
        $region26: #{tpu_custom_call.1} parent=23 // pred_check_branch
          %149 = sbr.rel (%p147) target = $region28
        $region27: #{tpu_custom_call.1} parent=23 // pred_region
          %s150 = smul.u32 32, %s20
          %p151 = scmp.lt.s32.totalorder %s19, 1
          %s152 = scalar_select %p151, %s19, 1
          %p153 = scmp.lt.s32.totalorder %s150, 31
          %s154 = scalar_select %p153, %s150, 31
          %s155 = smul.addr %s152, 32
          %s156 = sadd.s32 %s154, %s155
          %s157 = smul.addr %s156, 8
          %s158 = scalar_lea.vmem %s0, %s157
          %s159 = smul.u32 32, %s20
        $region28: #{tpu_custom_call.1} parent=23 // pred_fallthru
          _
      $region24: #{tpu_custom_call.1} parent=5 // pred_fallthru
        _
      %p160 = scmp.le.s32.totalorder 1, %s12
      %p161 = scmp.lt.s32.totalorder %s12, 3
      %p162 = pnand %p160, %p161
      %p163 = pneg %p162
      // Predicated region
      $region29: #{tpu_custom_call.1} parent=5 // pred_check
        _
      $region30: #{tpu_custom_call.1} parent=5 // pred_check_branch
        %165 = sbr.rel (%p162) target = $region32
      $region31: #{tpu_custom_call.1} parent=5 // pred_region
        %s166 = ssub.s32 %s12, 1
        %s167 = smul.u32 32, %s22
        %p168 = scmp.lt.s32.totalorder %s21, 1
        %s169 = scalar_select %p168, %s21, 1
        %p170 = scmp.lt.s32.totalorder %s167, 31
        %s171 = scalar_select %p170, %s167, 31
        %s172 = smul.addr %s169, 32
        %s173 = sadd.s32 %s171, %s172
        %s174 = smul.addr %s173, 8
        %s175 = scalar_lea.vmem %s0, %s174
        %p176 = pneg %p52
        %p177 = pneg %p49
        %p178 = pneg %p73
        %p179 = pneg %p70
        %p180 = pneg %p94
        %p181 = pneg %p91
        %p182 = pneg %p122
        %p183 = pneg %p119
        %s184 = sand.u32 %s109, 1
        %s185 = scalar_lea.sflag [#allocation3], %s184
        %s186 = sand.u32 %s109, 1
        %s187 = smul.addr %s186, 16
        %s188 = scalar_lea.vmem [#allocation2], %s187
        %s189 = smul.u32 32, %s22
        %p190 = scmp.lt.s32.totalorder %s21, 1
        %s191 = scalar_select %p190, %s21, 1
        %p192 = scmp.lt.s32.totalorder %s189, 31
        %s193 = scalar_select %p192, %s189, 31
        %s194 = smul.addr %s191, 32
        %s195 = sadd.s32 %s193, %s194
        %s196 = smul.addr %s195, 8
        %s197 = scalar_lea.vmem %s0, %s196
        %s198 = smul.u32 32, %s22
        %s199 = smul.u32 2, %s22
        %v200 = vld [vmem:[%s197] sm:$0xff]
        %v201 = vld [vmem:[%s197 + $0x8] sm:$0xff]
        %v202 = vld [vmem:[%s197 + $0x10] sm:$0xff]
        %v203 = vld [vmem:[%s197 + $0x18] sm:$0xff]
        %v204 = vld [vmem:[%s197 + $0x20] sm:$0xff]
        %v205 = vld [vmem:[%s197 + $0x28] sm:$0xff]
        %v206 = vld [vmem:[%s197 + $0x30] sm:$0xff]
        %v207 = vld [vmem:[%s197 + $0x38] sm:$0xff]
        %v208 = vld [vmem:[%s197 + $0x40] sm:$0xff]
        %v209 = vld [vmem:[%s197 + $0x48] sm:$0xff]
        %v210 = vld [vmem:[%s197 + $0x50] sm:$0xff]
        %v211 = vld [vmem:[%s197 + $0x58] sm:$0xff]
        %v212 = vld [vmem:[%s197 + $0x60] sm:$0xff]
        %v213 = vld [vmem:[%s197 + $0x68] sm:$0xff]
        %v214 = vld [vmem:[%s197 + $0x70] sm:$0xff]
        %v215 = vld [vmem:[%s197 + $0x78] sm:$0xff]
        %v216 = vld [vmem:[%s197 + $0x80] sm:$0xff]
        %v217 = vld [vmem:[%s197 + $0x88] sm:$0xff]
        %v218 = vld [vmem:[%s197 + $0x90] sm:$0xff]
        %v219 = vld [vmem:[%s197 + $0x98] sm:$0xff]
        %v220 = vld [vmem:[%s197 + $0xa0] sm:$0xff]
        %v221 = vld [vmem:[%s197 + $0xa8] sm:$0xff]
        %v222 = vld [vmem:[%s197 + $0xb0] sm:$0xff]
        %v223 = vld [vmem:[%s197 + $0xb8] sm:$0xff]
        %v224 = vld [vmem:[%s197 + $0xc0] sm:$0xff]
        %v225 = vld [vmem:[%s197 + $0xc8] sm:$0xff]
        %v226 = vld [vmem:[%s197 + $0xd0] sm:$0xff]
        %v227 = vld [vmem:[%s197 + $0xd8] sm:$0xff]
        %v228 = vld [vmem:[%s197 + $0xe0] sm:$0xff]
        %v229 = vld [vmem:[%s197 + $0xe8] sm:$0xff]
        %v230 = vld [vmem:[%s197 + $0xf0] sm:$0xff]
        %v231 = vld [vmem:[%s197 + $0xf8] sm:$0xff]
        %vm232 = vcmask 261120
        %v233 = vsel %vm232, %v200, 0.0
        %234 = vadd.xlane.f32.xlu0 %v233
        %v235 = vpop.xlane.xlu0 %234
        %v236 = vsel %vm232, %v201, 0.0
        %237 = vadd.xlane.f32.xlu0 %v236
        %v238 = vpop.xlane.xlu0 %237
        %v239 = vsel %vm232, %v202, 0.0
        %240 = vadd.xlane.f32.xlu0 %v239
        %v241 = vpop.xlane.xlu0 %240
        %v242 = vsel %vm232, %v203, 0.0
        %243 = vadd.xlane.f32.xlu0 %v242
        %v244 = vpop.xlane.xlu0 %243
        %v245 = vsel %vm232, %v204, 0.0
        %246 = vadd.xlane.f32.xlu0 %v245
        %v247 = vpop.xlane.xlu0 %246
        %v248 = vsel %vm232, %v205, 0.0
        %249 = vadd.xlane.f32.xlu0 %v248
        %v250 = vpop.xlane.xlu0 %249
        %v251 = vsel %vm232, %v206, 0.0
        %252 = vadd.xlane.f32.xlu0 %v251
        %v253 = vpop.xlane.xlu0 %252
        %v254 = vsel %vm232, %v207, 0.0
        %255 = vadd.xlane.f32.xlu0 %v254
        %v256 = vpop.xlane.xlu0 %255
        %v257 = vsel %vm232, %v208, 0.0
        %258 = vadd.xlane.f32.xlu0 %v257
        %v259 = vpop.xlane.xlu0 %258
        %v260 = vsel %vm232, %v209, 0.0
        %261 = vadd.xlane.f32.xlu0 %v260
        %v262 = vpop.xlane.xlu0 %261
        %v263 = vsel %vm232, %v210, 0.0
        %264 = vadd.xlane.f32.xlu0 %v263
        %v265 = vpop.xlane.xlu0 %264
        %v266 = vsel %vm232, %v211, 0.0
        %267 = vadd.xlane.f32.xlu0 %v266
        %v268 = vpop.xlane.xlu0 %267
        %v269 = vsel %vm232, %v212, 0.0
        %270 = vadd.xlane.f32.xlu0 %v269
        %v271 = vpop.xlane.xlu0 %270
        %v272 = vsel %vm232, %v213, 0.0
        %273 = vadd.xlane.f32.xlu0 %v272
        %v274 = vpop.xlane.xlu0 %273
        %v275 = vsel %vm232, %v214, 0.0
        %276 = vadd.xlane.f32.xlu0 %v275
        %v277 = vpop.xlane.xlu0 %276
        %v278 = vsel %vm232, %v215, 0.0
        %279 = vadd.xlane.f32.xlu0 %v278
        %v280 = vpop.xlane.xlu0 %279
        %v281 = vsel %vm232, %v216, 0.0
        %282 = vadd.xlane.f32.xlu0 %v281
        %v283 = vpop.xlane.xlu0 %282
        %v284 = vsel %vm232, %v217, 0.0
        %285 = vadd.xlane.f32.xlu0 %v284
        %v286 = vpop.xlane.xlu0 %285
        %v287 = vsel %vm232, %v218, 0.0
        %288 = vadd.xlane.f32.xlu0 %v287
        %v289 = vpop.xlane.xlu0 %288
        %v290 = vsel %vm232, %v219, 0.0
        %291 = vadd.xlane.f32.xlu0 %v290
        %v292 = vpop.xlane.xlu0 %291
        %v293 = vsel %vm232, %v220, 0.0
        %294 = vadd.xlane.f32.xlu0 %v293
        %v295 = vpop.xlane.xlu0 %294
        %v296 = vsel %vm232, %v221, 0.0
        %297 = vadd.xlane.f32.xlu0 %v296
        %v298 = vpop.xlane.xlu0 %297
        %v299 = vsel %vm232, %v222, 0.0
        %300 = vadd.xlane.f32.xlu0 %v299
        %v301 = vpop.xlane.xlu0 %300
        %v302 = vsel %vm232, %v223, 0.0
        %303 = vadd.xlane.f32.xlu0 %v302
        %v304 = vpop.xlane.xlu0 %303
        %v305 = vsel %vm232, %v224, 0.0
        %306 = vadd.xlane.f32.xlu0 %v305
        %v307 = vpop.xlane.xlu0 %306
        %v308 = vsel %vm232, %v225, 0.0
        %309 = vadd.xlane.f32.xlu0 %v308
        %v310 = vpop.xlane.xlu0 %309
        %v311 = vsel %vm232, %v226, 0.0
        %312 = vadd.xlane.f32.xlu0 %v311
        %v313 = vpop.xlane.xlu0 %312
        %v314 = vsel %vm232, %v227, 0.0
        %315 = vadd.xlane.f32.xlu0 %v314
        %v316 = vpop.xlane.xlu0 %315
        %v317 = vsel %vm232, %v228, 0.0
        %318 = vadd.xlane.f32.xlu0 %v317
        %v319 = vpop.xlane.xlu0 %318
        %v320 = vsel %vm232, %v229, 0.0
        %321 = vadd.xlane.f32.xlu0 %v320
        %v322 = vpop.xlane.xlu0 %321
        %v323 = vsel %vm232, %v230, 0.0
        %324 = vadd.xlane.f32.xlu0 %v323
        %v325 = vpop.xlane.xlu0 %324
        %v326 = vsel %vm232, %v231, 0.0
        %327 = vadd.xlane.f32.xlu0 %v326
        %v328 = vpop.xlane.xlu0 %327
        %v329 = vrcp.pop 32.0
        %v330 = vmul.f32 %v235, %v329
        %v331 = vmul.f32 %v238, %v329
        %v332 = vmul.f32 %v241, %v329
        %v333 = vmul.f32 %v244, %v329
        %v334 = vmul.f32 %v247, %v329
        %v335 = vmul.f32 %v250, %v329
        %v336 = vmul.f32 %v253, %v329
        %v337 = vmul.f32 %v256, %v329
        %v338 = vmul.f32 %v259, %v329
        %v339 = vmul.f32 %v262, %v329
        %v340 = vmul.f32 %v265, %v329
        %v341 = vmul.f32 %v268, %v329
        %v342 = vmul.f32 %v271, %v329
        %v343 = vmul.f32 %v274, %v329
        %v344 = vmul.f32 %v277, %v329
        %v345 = vmul.f32 %v280, %v329
        %v346 = vmul.f32 %v283, %v329
        %v347 = vmul.f32 %v286, %v329
        %v348 = vmul.f32 %v289, %v329
        %v349 = vmul.f32 %v292, %v329
        %v350 = vmul.f32 %v295, %v329
        %v351 = vmul.f32 %v298, %v329
        %v352 = vmul.f32 %v301, %v329
        %v353 = vmul.f32 %v304, %v329
        %v354 = vmul.f32 %v307, %v329
        %v355 = vmul.f32 %v310, %v329
        %v356 = vmul.f32 %v313, %v329
        %v357 = vmul.f32 %v316, %v329
        %v358 = vmul.f32 %v319, %v329
        %v359 = vmul.f32 %v322, %v329
        %v360 = vmul.f32 %v325, %v329
        %v361 = vmul.f32 %v328, %v329
        %v362 = vmul.f32 %v200, %v200
        %v363 = vmul.f32 %v201, %v201
        %v364 = vmul.f32 %v202, %v202
        %v365 = vmul.f32 %v203, %v203
        %v366 = vmul.f32 %v204, %v204
        %v367 = vmul.f32 %v205, %v205
        %v368 = vmul.f32 %v206, %v206
        %v369 = vmul.f32 %v207, %v207
        %v370 = vmul.f32 %v208, %v208
        %v371 = vmul.f32 %v209, %v209
        %v372 = vmul.f32 %v210, %v210
        %v373 = vmul.f32 %v211, %v211
        %v374 = vmul.f32 %v212, %v212
        %v375 = vmul.f32 %v213, %v213
        %v376 = vmul.f32 %v214, %v214
        %v377 = vmul.f32 %v215, %v215
        %v378 = vmul.f32 %v216, %v216
        %v379 = vmul.f32 %v217, %v217
        %v380 = vmul.f32 %v218, %v218
        %v381 = vmul.f32 %v219, %v219
        %v382 = vmul.f32 %v220, %v220
        %v383 = vmul.f32 %v221, %v221
        %v384 = vmul.f32 %v222, %v222
        %v385 = vmul.f32 %v223, %v223
        %v386 = vmul.f32 %v224, %v224
        %v387 = vmul.f32 %v225, %v225
        %v388 = vmul.f32 %v226, %v226
        %v389 = vmul.f32 %v227, %v227
        %v390 = vmul.f32 %v228, %v228
        %v391 = vmul.f32 %v229, %v229
        %v392 = vmul.f32 %v230, %v230
        %v393 = vmul.f32 %v231, %v231
        %v394 = vsel %vm232, %v362, 0.0
        %395 = vadd.xlane.f32.xlu0 %v394
        %v396 = vpop.xlane.xlu0 %395
        %v397 = vsel %vm232, %v363, 0.0
        %398 = vadd.xlane.f32.xlu0 %v397
        %v399 = vpop.xlane.xlu0 %398
        %v400 = vsel %vm232, %v364, 0.0
        %401 = vadd.xlane.f32.xlu0 %v400
        %v402 = vpop.xlane.xlu0 %401
        %v403 = vsel %vm232, %v365, 0.0
        %404 = vadd.xlane.f32.xlu0 %v403
        %v405 = vpop.xlane.xlu0 %404
        %v406 = vsel %vm232, %v366, 0.0
        %407 = vadd.xlane.f32.xlu0 %v406
        %v408 = vpop.xlane.xlu0 %407
        %v409 = vsel %vm232, %v367, 0.0
        %410 = vadd.xlane.f32.xlu0 %v409
        %v411 = vpop.xlane.xlu0 %410
        %v412 = vsel %vm232, %v368, 0.0
        %413 = vadd.xlane.f32.xlu0 %v412
        %v414 = vpop.xlane.xlu0 %413
        %v415 = vsel %vm232, %v369, 0.0
        %416 = vadd.xlane.f32.xlu0 %v415
        %v417 = vpop.xlane.xlu0 %416
        %v418 = vsel %vm232, %v370, 0.0
        %419 = vadd.xlane.f32.xlu0 %v418
        %v420 = vpop.xlane.xlu0 %419
        %v421 = vsel %vm232, %v371, 0.0
        %422 = vadd.xlane.f32.xlu0 %v421
        %v423 = vpop.xlane.xlu0 %422
        %v424 = vsel %vm232, %v372, 0.0
        %425 = vadd.xlane.f32.xlu0 %v424
        %v426 = vpop.xlane.xlu0 %425
        %v427 = vsel %vm232, %v373, 0.0
        %428 = vadd.xlane.f32.xlu0 %v427
        %v429 = vpop.xlane.xlu0 %428
        %v430 = vsel %vm232, %v374, 0.0
        %431 = vadd.xlane.f32.xlu0 %v430
        %v432 = vpop.xlane.xlu0 %431
        %v433 = vsel %vm232, %v375, 0.0
        %434 = vadd.xlane.f32.xlu0 %v433
        %v435 = vpop.xlane.xlu0 %434
        %v436 = vsel %vm232, %v376, 0.0
        %437 = vadd.xlane.f32.xlu0 %v436
        %v438 = vpop.xlane.xlu0 %437
        %v439 = vsel %vm232, %v377, 0.0
        %440 = vadd.xlane.f32.xlu0 %v439
        %v441 = vpop.xlane.xlu0 %440
        %v442 = vsel %vm232, %v378, 0.0
        %443 = vadd.xlane.f32.xlu0 %v442
        %v444 = vpop.xlane.xlu0 %443
        %v445 = vsel %vm232, %v379, 0.0
        %446 = vadd.xlane.f32.xlu0 %v445
        %v447 = vpop.xlane.xlu0 %446
        %v448 = vsel %vm232, %v380, 0.0
        %449 = vadd.xlane.f32.xlu0 %v448
        %v450 = vpop.xlane.xlu0 %449
        %v451 = vsel %vm232, %v381, 0.0
        %452 = vadd.xlane.f32.xlu0 %v451
        %v453 = vpop.xlane.xlu0 %452
        %v454 = vsel %vm232, %v382, 0.0
        %455 = vadd.xlane.f32.xlu0 %v454
        %v456 = vpop.xlane.xlu0 %455
        %v457 = vsel %vm232, %v383, 0.0
        %458 = vadd.xlane.f32.xlu0 %v457
        %v459 = vpop.xlane.xlu0 %458
        %v460 = vsel %vm232, %v384, 0.0
        %461 = vadd.xlane.f32.xlu0 %v460
        %v462 = vpop.xlane.xlu0 %461
        %v463 = vsel %vm232, %v385, 0.0
        %464 = vadd.xlane.f32.xlu0 %v463
        %v465 = vpop.xlane.xlu0 %464
        %v466 = vsel %vm232, %v386, 0.0
        %467 = vadd.xlane.f32.xlu0 %v466
        %v468 = vpop.xlane.xlu0 %467
        %v469 = vsel %vm232, %v387, 0.0
        %470 = vadd.xlane.f32.xlu0 %v469
        %v471 = vpop.xlane.xlu0 %470
        %v472 = vsel %vm232, %v388, 0.0
        %473 = vadd.xlane.f32.xlu0 %v472
        %v474 = vpop.xlane.xlu0 %473
        %v475 = vsel %vm232, %v389, 0.0
        %476 = vadd.xlane.f32.xlu0 %v475
        %v477 = vpop.xlane.xlu0 %476
        %v478 = vsel %vm232, %v390, 0.0
        %479 = vadd.xlane.f32.xlu0 %v478
        %v480 = vpop.xlane.xlu0 %479
        %v481 = vsel %vm232, %v391, 0.0
        %482 = vadd.xlane.f32.xlu0 %v481
        %v483 = vpop.xlane.xlu0 %482
        %v484 = vsel %vm232, %v392, 0.0
        %485 = vadd.xlane.f32.xlu0 %v484
        %v486 = vpop.xlane.xlu0 %485
        %v487 = vsel %vm232, %v393, 0.0
        %488 = vadd.xlane.f32.xlu0 %v487
        %v489 = vpop.xlane.xlu0 %488
        %v490 = vmul.f32 %v396, %v329
        %v491 = vmul.f32 %v399, %v329
        %v492 = vmul.f32 %v402, %v329
        %v493 = vmul.f32 %v405, %v329
        %v494 = vmul.f32 %v408, %v329
        %v495 = vmul.f32 %v411, %v329
        %v496 = vmul.f32 %v414, %v329
        %v497 = vmul.f32 %v417, %v329
        %v498 = vmul.f32 %v420, %v329
        %v499 = vmul.f32 %v423, %v329
        %v500 = vmul.f32 %v426, %v329
        %v501 = vmul.f32 %v429, %v329
        %v502 = vmul.f32 %v432, %v329
        %v503 = vmul.f32 %v435, %v329
        %v504 = vmul.f32 %v438, %v329
        %v505 = vmul.f32 %v441, %v329
        %v506 = vmul.f32 %v444, %v329
        %v507 = vmul.f32 %v447, %v329
        %v508 = vmul.f32 %v450, %v329
        %v509 = vmul.f32 %v453, %v329
        %v510 = vmul.f32 %v456, %v329
        %v511 = vmul.f32 %v459, %v329
        %v512 = vmul.f32 %v462, %v329
        %v513 = vmul.f32 %v465, %v329
        %v514 = vmul.f32 %v468, %v329
        %v515 = vmul.f32 %v471, %v329
        %v516 = vmul.f32 %v474, %v329
        %v517 = vmul.f32 %v477, %v329
        %v518 = vmul.f32 %v480, %v329
        %v519 = vmul.f32 %v483, %v329
        %v520 = vmul.f32 %v486, %v329
        %v521 = vmul.f32 %v489, %v329
        %v522 = vmul.f32 %v330, %v330
        %v523 = vmul.f32 %v331, %v331
        %v524 = vmul.f32 %v332, %v332
        %v525 = vmul.f32 %v333, %v333
        %v526 = vmul.f32 %v334, %v334
        %v527 = vmul.f32 %v335, %v335
        %v528 = vmul.f32 %v336, %v336
        %v529 = vmul.f32 %v337, %v337
        %v530 = vmul.f32 %v338, %v338
        %v531 = vmul.f32 %v339, %v339
        %v532 = vmul.f32 %v340, %v340
        %v533 = vmul.f32 %v341, %v341
        %v534 = vmul.f32 %v342, %v342
        %v535 = vmul.f32 %v343, %v343
        %v536 = vmul.f32 %v344, %v344
        %v537 = vmul.f32 %v345, %v345
        %v538 = vmul.f32 %v346, %v346
        %v539 = vmul.f32 %v347, %v347
        %v540 = vmul.f32 %v348, %v348
        %v541 = vmul.f32 %v349, %v349
        %v542 = vmul.f32 %v350, %v350
        %v543 = vmul.f32 %v351, %v351
        %v544 = vmul.f32 %v352, %v352
        %v545 = vmul.f32 %v353, %v353
        %v546 = vmul.f32 %v354, %v354
        %v547 = vmul.f32 %v355, %v355
        %v548 = vmul.f32 %v356, %v356
        %v549 = vmul.f32 %v357, %v357
        %v550 = vmul.f32 %v358, %v358
        %v551 = vmul.f32 %v359, %v359
        %v552 = vmul.f32 %v360, %v360
        %v553 = vmul.f32 %v361, %v361
        %v554 = vsub.f32 %v490, %v522
        %v555 = vsub.f32 %v491, %v523
        %v556 = vsub.f32 %v492, %v524
        %v557 = vsub.f32 %v493, %v525
        %v558 = vsub.f32 %v494, %v526
        %v559 = vsub.f32 %v495, %v527
        %v560 = vsub.f32 %v496, %v528
        %v561 = vsub.f32 %v497, %v529
        %v562 = vsub.f32 %v498, %v530
        %v563 = vsub.f32 %v499, %v531
        %v564 = vsub.f32 %v500, %v532
        %v565 = vsub.f32 %v501, %v533
        %v566 = vsub.f32 %v502, %v534
        %v567 = vsub.f32 %v503, %v535
        %v568 = vsub.f32 %v504, %v536
        %v569 = vsub.f32 %v505, %v537
        %v570 = vsub.f32 %v506, %v538
        %v571 = vsub.f32 %v507, %v539
        %v572 = vsub.f32 %v508, %v540
        %v573 = vsub.f32 %v509, %v541
        %v574 = vsub.f32 %v510, %v542
        %v575 = vsub.f32 %v511, %v543
        %v576 = vsub.f32 %v512, %v544
        %v577 = vsub.f32 %v513, %v545
        %v578 = vsub.f32 %v514, %v546
        %v579 = vsub.f32 %v515, %v547
        %v580 = vsub.f32 %v516, %v548
        %v581 = vsub.f32 %v517, %v549
        %v582 = vsub.f32 %v518, %v550
        %v583 = vsub.f32 %v519, %v551
        %v584 = vsub.f32 %v520, %v552
        %v585 = vsub.f32 %v521, %v553
        %v586 = vmax.f32 %v554, 0.0
        %v587 = vmax.f32 %v555, 0.0
        %v588 = vmax.f32 %v556, 0.0
        %v589 = vmax.f32 %v557, 0.0
        %v590 = vmax.f32 %v558, 0.0
        %v591 = vmax.f32 %v559, 0.0
        %v592 = vmax.f32 %v560, 0.0
        %v593 = vmax.f32 %v561, 0.0
        %v594 = vmax.f32 %v562, 0.0
        %v595 = vmax.f32 %v563, 0.0
        %v596 = vmax.f32 %v564, 0.0
        %v597 = vmax.f32 %v565, 0.0
        %v598 = vmax.f32 %v566, 0.0
        %v599 = vmax.f32 %v567, 0.0
        %v600 = vmax.f32 %v568, 0.0
        %v601 = vmax.f32 %v569, 0.0
        %v602 = vmax.f32 %v570, 0.0
        %v603 = vmax.f32 %v571, 0.0
        %v604 = vmax.f32 %v572, 0.0
        %v605 = vmax.f32 %v573, 0.0
        %v606 = vmax.f32 %v574, 0.0
        %v607 = vmax.f32 %v575, 0.0
        %v608 = vmax.f32 %v576, 0.0
        %v609 = vmax.f32 %v577, 0.0
        %v610 = vmax.f32 %v578, 0.0
        %v611 = vmax.f32 %v579, 0.0
        %v612 = vmax.f32 %v580, 0.0
        %v613 = vmax.f32 %v581, 0.0
        %v614 = vmax.f32 %v582, 0.0
        %v615 = vmax.f32 %v583, 0.0
        %v616 = vmax.f32 %v584, 0.0
        %v617 = vmax.f32 %v585, 0.0
        %v618 = vsub.f32 %v200, %v330
        %v619 = vsub.f32 %v201, %v331
        %v620 = vsub.f32 %v202, %v332
        %v621 = vsub.f32 %v203, %v333
        %v622 = vsub.f32 %v204, %v334
        %v623 = vsub.f32 %v205, %v335
        %v624 = vsub.f32 %v206, %v336
        %v625 = vsub.f32 %v207, %v337
        %v626 = vsub.f32 %v208, %v338
        %v627 = vsub.f32 %v209, %v339
        %v628 = vsub.f32 %v210, %v340
        %v629 = vsub.f32 %v211, %v341
        %v630 = vsub.f32 %v212, %v342
        %v631 = vsub.f32 %v213, %v343
        %v632 = vsub.f32 %v214, %v344
        %v633 = vsub.f32 %v215, %v345
        %v634 = vsub.f32 %v216, %v346
        %v635 = vsub.f32 %v217, %v347
        %v636 = vsub.f32 %v218, %v348
        %v637 = vsub.f32 %v219, %v349
        %v638 = vsub.f32 %v220, %v350
        %v639 = vsub.f32 %v221, %v351
        %v640 = vsub.f32 %v222, %v352
        %v641 = vsub.f32 %v223, %v353
        %v642 = vsub.f32 %v224, %v354
        %v643 = vsub.f32 %v225, %v355
        %v644 = vsub.f32 %v226, %v356
        %v645 = vsub.f32 %v227, %v357
        %v646 = vsub.f32 %v228, %v358
        %v647 = vsub.f32 %v229, %v359
        %v648 = vsub.f32 %v230, %v360
        %v649 = vsub.f32 %v231, %v361
        %v650 = vadd.f32 %v586, 1e-05
        %v651 = vadd.f32 %v587, 1e-05
        %v652 = vadd.f32 %v588, 1e-05
        %v653 = vadd.f32 %v589, 1e-05
        %v654 = vadd.f32 %v590, 1e-05
        %v655 = vadd.f32 %v591, 1e-05
        %v656 = vadd.f32 %v592, 1e-05
        %v657 = vadd.f32 %v593, 1e-05
        %v658 = vadd.f32 %v594, 1e-05
        %v659 = vadd.f32 %v595, 1e-05
        %v660 = vadd.f32 %v596, 1e-05
        %v661 = vadd.f32 %v597, 1e-05
        %v662 = vadd.f32 %v598, 1e-05
        %v663 = vadd.f32 %v599, 1e-05
        %v664 = vadd.f32 %v600, 1e-05
        %v665 = vadd.f32 %v601, 1e-05
        %v666 = vadd.f32 %v602, 1e-05
        %v667 = vadd.f32 %v603, 1e-05
        %v668 = vadd.f32 %v604, 1e-05
        %v669 = vadd.f32 %v605, 1e-05
        %v670 = vadd.f32 %v606, 1e-05
        %v671 = vadd.f32 %v607, 1e-05
        %v672 = vadd.f32 %v608, 1e-05
        %v673 = vadd.f32 %v609, 1e-05
        %v674 = vadd.f32 %v610, 1e-05
        %v675 = vadd.f32 %v611, 1e-05
        %v676 = vadd.f32 %v612, 1e-05
        %v677 = vadd.f32 %v613, 1e-05
        %v678 = vadd.f32 %v614, 1e-05
        %v679 = vadd.f32 %v615, 1e-05
        %v680 = vadd.f32 %v616, 1e-05
        %v681 = vadd.f32 %v617, 1e-05
        %v682 = vrsqrt.pop %v650
        %v683 = vrsqrt.pop %v651
        %v684 = vrsqrt.pop %v652
        %v685 = vrsqrt.pop %v653
        %v686 = vrsqrt.pop %v654
        %v687 = vrsqrt.pop %v655
        %v688 = vrsqrt.pop %v656
        %v689 = vrsqrt.pop %v657
        %v690 = vrsqrt.pop %v658
        %v691 = vrsqrt.pop %v659
        %v692 = vrsqrt.pop %v660
        %v693 = vrsqrt.pop %v661
        %v694 = vrsqrt.pop %v662
        %v695 = vrsqrt.pop %v663
        %v696 = vrsqrt.pop %v664
        %v697 = vrsqrt.pop %v665
        %v698 = vrsqrt.pop %v666
        %v699 = vrsqrt.pop %v667
        %v700 = vrsqrt.pop %v668
        %v701 = vrsqrt.pop %v669
        %v702 = vrsqrt.pop %v670
        %v703 = vrsqrt.pop %v671
        %v704 = vrsqrt.pop %v672
        %v705 = vrsqrt.pop %v673
        %v706 = vrsqrt.pop %v674
        %v707 = vrsqrt.pop %v675
        %v708 = vrsqrt.pop %v676
        %v709 = vrsqrt.pop %v677
        %v710 = vrsqrt.pop %v678
        %v711 = vrsqrt.pop %v679
        %v712 = vrsqrt.pop %v680
        %v713 = vrsqrt.pop %v681
        %v714 = vmul.f32 %v618, %v682
        %v715 = vmul.f32 %v619, %v683
        %v716 = vmul.f32 %v620, %v684
        %v717 = vmul.f32 %v621, %v685
        %v718 = vmul.f32 %v622, %v686
        %v719 = vmul.f32 %v623, %v687
        %v720 = vmul.f32 %v624, %v688
        %v721 = vmul.f32 %v625, %v689
        %v722 = vmul.f32 %v626, %v690
        %v723 = vmul.f32 %v627, %v691
        %v724 = vmul.f32 %v628, %v692
        %v725 = vmul.f32 %v629, %v693
        %v726 = vmul.f32 %v630, %v694
        %v727 = vmul.f32 %v631, %v695
        %v728 = vmul.f32 %v632, %v696
        %v729 = vmul.f32 %v633, %v697
        %v730 = vmul.f32 %v634, %v698
        %v731 = vmul.f32 %v635, %v699
        %v732 = vmul.f32 %v636, %v700
        %v733 = vmul.f32 %v637, %v701
        %v734 = vmul.f32 %v638, %v702
        %v735 = vmul.f32 %v639, %v703
        %v736 = vmul.f32 %v640, %v704
        %v737 = vmul.f32 %v641, %v705
        %v738 = vmul.f32 %v642, %v706
        %v739 = vmul.f32 %v643, %v707
        %v740 = vmul.f32 %v644, %v708
        %v741 = vmul.f32 %v645, %v709
        %v742 = vmul.f32 %v646, %v710
        %v743 = vmul.f32 %v647, %v711
        %v744 = vmul.f32 %v648, %v712
        %v745 = vmul.f32 %v649, %v713
        %v746 = vld [vmem:[%s1] sm:$0xff]
        %v747 = vld [vmem:[%s1 + $0x8] sm:$0xff]
        %v748 = vld [vmem:[%s1 + $0x10] sm:$0xff]
        %v749 = vld [vmem:[%s1 + $0x18] sm:$0xff]
        %v751 = vsel %vm232, %v714, 0
        %v754 = vsel %vm232, %v715, 0
        %v757 = vsel %vm232, %v716, 0
        %v760 = vsel %vm232, %v717, 0
        %v763 = vsel %vm232, %v718, 0
        %v766 = vsel %vm232, %v719, 0
        %v769 = vsel %vm232, %v720, 0
        %v772 = vsel %vm232, %v721, 0
        %v775 = vsel %vm232, %v722, 0
        %v778 = vsel %vm232, %v723, 0
        %v781 = vsel %vm232, %v724, 0
        %v784 = vsel %vm232, %v725, 0
        %v787 = vsel %vm232, %v726, 0
        %v790 = vsel %vm232, %v727, 0
        %v793 = vsel %vm232, %v728, 0
        %v796 = vsel %vm232, %v729, 0
        %v799 = vsel %vm232, %v730, 0
        %v802 = vsel %vm232, %v731, 0
        %v805 = vsel %vm232, %v732, 0
        %v808 = vsel %vm232, %v733, 0
        %v811 = vsel %vm232, %v734, 0
        %v814 = vsel %vm232, %v735, 0
        %v817 = vsel %vm232, %v736, 0
        %v820 = vsel %vm232, %v737, 0
        %v823 = vsel %vm232, %v738, 0
        %v826 = vsel %vm232, %v739, 0
        %v829 = vsel %vm232, %v740, 0
        %v832 = vsel %vm232, %v741, 0
        %v835 = vsel %vm232, %v742, 0
        %v838 = vsel %vm232, %v743, 0
        %v841 = vsel %vm232, %v744, 0
        %v844 = vsel %vm232, %v745, 0
        %846 = vmatprep.subr.mxu0 0.0
        %847 = vmatpush1.msra.mxu0 %v746
        %848 = vmatprep.subr.mxu0 0.0
        %849 = vmatpush1.msra.mxu0 %v747
        %850 = vmatprep.subr.mxu0 0.0
        %851 = vmatpush1.msra.mxu0 %v748
        %852 = vmatprep.subr.mxu0 0.0
        %853 = vmatpush1.msra.mxu0 %v749
        %854 = vmatprep.subr.mxu0 0.0
        %855 = vmatpush1.msra.mxu0 0.0
        %856 = vmatprep.subr.mxu0 0.0
        %857 = vmatpush1.msra.mxu0 0.0
        %858 = vmatprep.subr.mxu0 0.0
        %859 = vmatpush1.msra.mxu0 0.0
        %860 = vmatprep.subr.mxu0 0.0
        %861 = vmatpush1.msra.mxu0 0.0
        %862 = vmatprep.subr.mxu0 0.0
        %863 = vmatpush1.msra.mxu0 0.0
        %864 = vmatprep.subr.mxu0 0.0
        %865 = vmatpush1.msra.mxu0 0.0
        %866 = vmatprep.subr.mxu0 0.0
        %867 = vmatpush1.msra.mxu0 0.0
        %868 = vmatprep.subr.mxu0 0.0
        %869 = vmatpush1.msra.mxu0 0.0
        %870 = vmatprep.subr.mxu0 0.0
        %871 = vmatpush1.msra.mxu0 0.0
        %872 = vmatprep.subr.mxu0 0.0
        %873 = vmatpush1.msra.mxu0 0.0
        %874 = vmatprep.subr.mxu0 0.0
        %875 = vmatpush1.msra.mxu0 0.0
        %876 = vmatprep.subr.mxu0 0.0
        %877 = vmatpush1.msra.mxu0 0.0
        %878 = vmatprep.subr.mxu0 0.0
        %879 = vmatpush1.msra.mxu0 0.0
        %880 = vmatprep.subr.mxu0 0.0
        %881 = vmatpush1.msra.mxu0 0.0
        %882 = vmatprep.subr.mxu0 0.0
        %883 = vmatpush1.msra.mxu0 0.0
        %884 = vmatprep.subr.mxu0 0.0
        %885 = vmatpush1.msra.mxu0 0.0
        %886 = vmatprep.subr.mxu0 0.0
        %887 = vmatpush1.msra.mxu0 0.0
        %888 = vmatprep.subr.mxu0 0.0
        %889 = vmatpush1.msra.mxu0 0.0
        %890 = vmatprep.subr.mxu0 0.0
        %891 = vmatpush1.msra.mxu0 0.0
        %892 = vmatprep.subr.mxu0 0.0
        %893 = vmatpush1.msra.mxu0 0.0
        %894 = vmatprep.subr.mxu0 0.0
        %895 = vmatpush1.msra.mxu0 0.0
        %896 = vmatprep.subr.mxu0 0.0
        %897 = vmatpush1.msra.mxu0 0.0
        %898 = vmatprep.subr.mxu0 0.0
        %899 = vmatpush1.msra.mxu0 0.0
        %900 = vmatprep.subr.mxu0 0.0
        %901 = vmatpush1.msra.mxu0 0.0
        %902 = vmatprep.subr.mxu0 0.0
        %903 = vmatpush1.msra.mxu0 0.0
        %904 = vmatprep.subr.mxu0 0.0
        %905 = vmatpush1.msra.mxu0 0.0
        %906 = vmatprep.subr.mxu0 0.0
        %907 = vmatpush1.msra.mxu0 0.0
        %908 = vmatprep.subr.mxu0 0.0
        %909 = vmatpush1.msra.mxu0 0.0
        %910 = vmatprep.mubr.f32.mxu0 0.0
        %911 = vmatmul.mubr.f32.gmra.mrb[0].mxu0 %v751
        %v912 = vpop.f32.mrb[0].mxu0
        %v913 = vadd.f32 0.0, %v912
        %v914 = vpop.f32.mrb[0].mxu0
        %915 = vmatprep.mubr.f32.mxu0 0.0
        %916 = vmatmul.mubr.f32.gmra.mrb[0].mxu0 %v754
        %v917 = vpop.f32.mrb[0].mxu0
        %v918 = vadd.f32 0.0, %v917
        %v919 = vpop.f32.mrb[0].mxu0
        %920 = vmatprep.mubr.f32.mxu0 0.0
        %921 = vmatmul.mubr.f32.gmra.mrb[0].mxu0 %v757
        %v922 = vpop.f32.mrb[0].mxu0
        %v923 = vadd.f32 0.0, %v922
        %v924 = vpop.f32.mrb[0].mxu0
        %925 = vmatprep.mubr.f32.mxu0 0.0
        %926 = vmatmul.mubr.f32.gmra.mrb[0].mxu0 %v760
        %v927 = vpop.f32.mrb[0].mxu0
        %v928 = vadd.f32 0.0, %v927
        %v929 = vpop.f32.mrb[0].mxu0
        %930 = vmatprep.mubr.f32.mxu0 0.0
        %931 = vmatmul.mubr.f32.gmra.mrb[0].mxu0 %v763
        %v932 = vpop.f32.mrb[0].mxu0
        %v933 = vadd.f32 0.0, %v932
        %v934 = vpop.f32.mrb[0].mxu0
        %935 = vmatprep.mubr.f32.mxu0 0.0
        %936 = vmatmul.mubr.f32.gmra.mrb[0].mxu0 %v766
        %v937 = vpop.f32.mrb[0].mxu0
        %v938 = vadd.f32 0.0, %v937
        %v939 = vpop.f32.mrb[0].mxu0
        %940 = vmatprep.mubr.f32.mxu0 0.0
        %941 = vmatmul.mubr.f32.gmra.mrb[0].mxu0 %v769
        %v942 = vpop.f32.mrb[0].mxu0
        %v943 = vadd.f32 0.0, %v942
        %v944 = vpop.f32.mrb[0].mxu0
        %945 = vmatprep.mubr.f32.mxu0 0.0
        %946 = vmatmul.mubr.f32.gmra.mrb[0].mxu0 %v772
        %v947 = vpop.f32.mrb[0].mxu0
        %v948 = vadd.f32 0.0, %v947
        %v949 = vpop.f32.mrb[0].mxu0
        %950 = vmatprep.mubr.f32.mxu0 0.0
        %951 = vmatmul.mubr.f32.gmra.mrb[0].mxu0 %v775
        %v952 = vpop.f32.mrb[0].mxu0
        %v953 = vadd.f32 0.0, %v952
        %v954 = vpop.f32.mrb[0].mxu0
        %955 = vmatprep.mubr.f32.mxu0 0.0
        %956 = vmatmul.mubr.f32.gmra.mrb[0].mxu0 %v778
        %v957 = vpop.f32.mrb[0].mxu0
        %v958 = vadd.f32 0.0, %v957
        %v959 = vpop.f32.mrb[0].mxu0
        %960 = vmatprep.mubr.f32.mxu0 0.0
        %961 = vmatmul.mubr.f32.gmra.mrb[0].mxu0 %v781
        %v962 = vpop.f32.mrb[0].mxu0
        %v963 = vadd.f32 0.0, %v962
        %v964 = vpop.f32.mrb[0].mxu0
        %965 = vmatprep.mubr.f32.mxu0 0.0
        %966 = vmatmul.mubr.f32.gmra.mrb[0].mxu0 %v784
        %v967 = vpop.f32.mrb[0].mxu0
        %v968 = vadd.f32 0.0, %v967
        %v969 = vpop.f32.mrb[0].mxu0
        %970 = vmatprep.mubr.f32.mxu0 0.0
        %971 = vmatmul.mubr.f32.gmra.mrb[0].mxu0 %v787
        %v972 = vpop.f32.mrb[0].mxu0
        %v973 = vadd.f32 0.0, %v972
        %v974 = vpop.f32.mrb[0].mxu0
        %975 = vmatprep.mubr.f32.mxu0 0.0
        %976 = vmatmul.mubr.f32.gmra.mrb[0].mxu0 %v790
        %v977 = vpop.f32.mrb[0].mxu0
        %v978 = vadd.f32 0.0, %v977
        %v979 = vpop.f32.mrb[0].mxu0
        %980 = vmatprep.mubr.f32.mxu0 0.0
        %981 = vmatmul.mubr.f32.gmra.mrb[0].mxu0 %v793
        %v982 = vpop.f32.mrb[0].mxu0
        %v983 = vadd.f32 0.0, %v982
        %v984 = vpop.f32.mrb[0].mxu0
        %985 = vmatprep.mubr.f32.mxu0 0.0
        %986 = vmatmul.mubr.f32.gmra.mrb[0].mxu0 %v796
        %v987 = vpop.f32.mrb[0].mxu0
        %v988 = vadd.f32 0.0, %v987
        %v989 = vpop.f32.mrb[0].mxu0
        %990 = vmatprep.mubr.f32.mxu0 0.0
        %991 = vmatmul.mubr.f32.gmra.mrb[0].mxu0 %v799
        %v992 = vpop.f32.mrb[0].mxu0
        %v993 = vadd.f32 0.0, %v992
        %v994 = vpop.f32.mrb[0].mxu0
        %995 = vmatprep.mubr.f32.mxu0 0.0
        %996 = vmatmul.mubr.f32.gmra.mrb[0].mxu0 %v802
        %v997 = vpop.f32.mrb[0].mxu0
        %v998 = vadd.f32 0.0, %v997
        %v999 = vpop.f32.mrb[0].mxu0
        %1000 = vmatprep.mubr.f32.mxu0 0.0
        %1001 = vmatmul.mubr.f32.gmra.mrb[0].mxu0 %v805
        %v1002 = vpop.f32.mrb[0].mxu0
        %v1003 = vadd.f32 0.0, %v1002
        %v1004 = vpop.f32.mrb[0].mxu0
        %1005 = vmatprep.mubr.f32.mxu0 0.0
        %1006 = vmatmul.mubr.f32.gmra.mrb[0].mxu0 %v808
        %v1007 = vpop.f32.mrb[0].mxu0
        %v1008 = vadd.f32 0.0, %v1007
        %v1009 = vpop.f32.mrb[0].mxu0
        %1010 = vmatprep.mubr.f32.mxu0 0.0
        %1011 = vmatmul.mubr.f32.gmra.mrb[0].mxu0 %v811
        %v1012 = vpop.f32.mrb[0].mxu0
        %v1013 = vadd.f32 0.0, %v1012
        %v1014 = vpop.f32.mrb[0].mxu0
        %1015 = vmatprep.mubr.f32.mxu0 0.0
        %1016 = vmatmul.mubr.f32.gmra.mrb[0].mxu0 %v814
        %v1017 = vpop.f32.mrb[0].mxu0
        %v1018 = vadd.f32 0.0, %v1017
        %v1019 = vpop.f32.mrb[0].mxu0
        %1020 = vmatprep.mubr.f32.mxu0 0.0
        %1021 = vmatmul.mubr.f32.gmra.mrb[0].mxu0 %v817
        %v1022 = vpop.f32.mrb[0].mxu0
        %v1023 = vadd.f32 0.0, %v1022
        %v1024 = vpop.f32.mrb[0].mxu0
        %1025 = vmatprep.mubr.f32.mxu0 0.0
        %1026 = vmatmul.mubr.f32.gmra.mrb[0].mxu0 %v820
        %v1027 = vpop.f32.mrb[0].mxu0
        %v1028 = vadd.f32 0.0, %v1027
        %v1029 = vpop.f32.mrb[0].mxu0
        %1030 = vmatprep.mubr.f32.mxu0 0.0
        %1031 = vmatmul.mubr.f32.gmra.mrb[0].mxu0 %v823
        %v1032 = vpop.f32.mrb[0].mxu0
        %v1033 = vadd.f32 0.0, %v1032
        %v1034 = vpop.f32.mrb[0].mxu0
        %1035 = vmatprep.mubr.f32.mxu0 0.0
        %1036 = vmatmul.mubr.f32.gmra.mrb[0].mxu0 %v826
        %v1037 = vpop.f32.mrb[0].mxu0
        %v1038 = vadd.f32 0.0, %v1037
        %v1039 = vpop.f32.mrb[0].mxu0
        %1040 = vmatprep.mubr.f32.mxu0 0.0
        %1041 = vmatmul.mubr.f32.gmra.mrb[0].mxu0 %v829
        %v1042 = vpop.f32.mrb[0].mxu0
        %v1043 = vadd.f32 0.0, %v1042
        %v1044 = vpop.f32.mrb[0].mxu0
        %1045 = vmatprep.mubr.f32.mxu0 0.0
        %1046 = vmatmul.mubr.f32.gmra.mrb[0].mxu0 %v832
        %v1047 = vpop.f32.mrb[0].mxu0
        %v1048 = vadd.f32 0.0, %v1047
        %v1049 = vpop.f32.mrb[0].mxu0
        %1050 = vmatprep.mubr.f32.mxu0 0.0
        %1051 = vmatmul.mubr.f32.gmra.mrb[0].mxu0 %v835
        %v1052 = vpop.f32.mrb[0].mxu0
        %v1053 = vadd.f32 0.0, %v1052
        %v1054 = vpop.f32.mrb[0].mxu0
        %1055 = vmatprep.mubr.f32.mxu0 0.0
        %1056 = vmatmul.mubr.f32.gmra.mrb[0].mxu0 %v838
        %v1057 = vpop.f32.mrb[0].mxu0
        %v1058 = vadd.f32 0.0, %v1057
        %v1059 = vpop.f32.mrb[0].mxu0
        %1060 = vmatprep.mubr.f32.mxu0 0.0
        %1061 = vmatmul.mubr.f32.gmra.mrb[0].mxu0 %v841
        %v1062 = vpop.f32.mrb[0].mxu0
        %v1063 = vadd.f32 0.0, %v1062
        %v1064 = vpop.f32.mrb[0].mxu0
        %1065 = vmatprep.mubr.f32.mxu0 0.0
        %1066 = vmatmul.mubr.f32.gmra.mrb[0].mxu0 %v844
        %v1067 = vpop.f32.mrb[0].mxu0
        %v1068 = vadd.f32 0.0, %v1067
        %v1069 = vpop.f32.mrb[0].mxu0
        %1070 = vdwg.mxu0
        %1071 = vxpose.xlu0.b32.start [1/16] %v913, 128
        %1072 = vxpose.xlu0.b32.cont [2/16] %v918, 128
        %1073 = vxpose.xlu0.b32.cont [3/16] %v923, 128
        %1074 = vxpose.xlu0.b32.cont [4/16] %v928, 128
        %1075 = vxpose.xlu0.b32.cont [5/16] %v933, 128
        %1076 = vxpose.xlu0.b32.cont [6/16] %v938, 128
        %1077 = vxpose.xlu0.b32.cont [7/16] %v943, 128
        %1078 = vxpose.xlu0.b32.cont [8/16] %v948, 128
        %1079 = vxpose.xlu0.b32.cont [9/16] %v953, 128
        %1080 = vxpose.xlu0.b32.cont [10/16] %v958, 128
        %1081 = vxpose.xlu0.b32.cont [11/16] %v963, 128
        %1082 = vxpose.xlu0.b32.cont [12/16] %v968, 128
        %1083 = vxpose.xlu0.b32.cont [13/16] %v973, 128
        %1084 = vxpose.xlu0.b32.cont [14/16] %v978, 128
        %1085 = vxpose.xlu0.b32.cont [15/16] %v983, 128
        %1086 = vxpose.xlu0.b32.end [16/16] %v988, 128
        %v1087 = vpop.trf.xlu0
        %v1088 = vpop.trf.xlu0
        %v1089 = vpop.trf.xlu0
        %v1090 = vpop.trf.xlu0
        %v1091 = vpop.trf.xlu0
        %v1092 = vpop.trf.xlu0
        %v1093 = vpop.trf.xlu0
        %v1094 = vpop.trf.xlu0
        %v1095 = vpop.trf.xlu0
        %v1096 = vpop.trf.xlu0
        %v1097 = vpop.trf.xlu0
        %v1098 = vpop.trf.xlu0
        %v1099 = vpop.trf.xlu0
        %v1100 = vpop.trf.xlu0
        %v1101 = vpop.trf.xlu0
        %v1102 = vpop.trf.xlu0
        %1103 = vxpose.xlu0.b32.start [1/16] %v993, 128
        %1104 = vxpose.xlu0.b32.cont [2/16] %v998, 128
        %1105 = vxpose.xlu0.b32.cont [3/16] %v1003, 128
        %1106 = vxpose.xlu0.b32.cont [4/16] %v1008, 128
        %1107 = vxpose.xlu0.b32.cont [5/16] %v1013, 128
        %1108 = vxpose.xlu0.b32.cont [6/16] %v1018, 128
        %1109 = vxpose.xlu0.b32.cont [7/16] %v1023, 128
        %1110 = vxpose.xlu0.b32.cont [8/16] %v1028, 128
        %1111 = vxpose.xlu0.b32.cont [9/16] %v1033, 128
        %1112 = vxpose.xlu0.b32.cont [10/16] %v1038, 128
        %1113 = vxpose.xlu0.b32.cont [11/16] %v1043, 128
        %1114 = vxpose.xlu0.b32.cont [12/16] %v1048, 128
        %1115 = vxpose.xlu0.b32.cont [13/16] %v1053, 128
        %1116 = vxpose.xlu0.b32.cont [14/16] %v1058, 128
        %1117 = vxpose.xlu0.b32.cont [15/16] %v1063, 128
        %1118 = vxpose.xlu0.b32.end [16/16] %v1068, 128
        %v1119 = vpop.trf.xlu0
        %v1120 = vpop.trf.xlu0
        %v1121 = vpop.trf.xlu0
        %v1122 = vpop.trf.xlu0
        %v1123 = vpop.trf.xlu0
        %v1124 = vpop.trf.xlu0
        %v1125 = vpop.trf.xlu0
        %v1126 = vpop.trf.xlu0
        %v1127 = vpop.trf.xlu0
        %v1128 = vpop.trf.xlu0
        %v1129 = vpop.trf.xlu0
        %v1130 = vpop.trf.xlu0
        %v1131 = vpop.trf.xlu0
        %v1132 = vpop.trf.xlu0
        %v1133 = vpop.trf.xlu0
        %v1134 = vpop.trf.xlu0
        %v1135 = vld [vmem:[%s2] sm:$0xff]
        %1137 = vset.pattern.permute.xlu0 0
        %1138 = vperm.xlu0 %1137, %v1135
        %v1139 = vpop.permute.xlu0 %1138
        %v1141 = vadd.f32 %v1087, %v1139
        %v1142 = vadd.f32 %v1119, %v1139
        %1143 = vst [vmem:[%s188] sm:$0xff] %v1141
        %1144 = vst [vmem:[%s188 + $0x8] sm:$0xff] %v1142
        %s1145 = sand.u32 %s109, 1
        %s1146 = scalar_lea.sflag [#allocation3], %s1145
        %s1147 = sand.u32 %s109, 1
        %s1148 = smul.addr %s1147, 16
        %s1149 = scalar_lea.vmem [#allocation2], %s1148
        // Predicated region
        $region33: #{tpu_custom_call.1} parent=31 // pred_check
          %p1150 = pneg %p119
        $region34: #{tpu_custom_call.1} parent=31 // pred_check_branch
          %1152 = sbr.rel (%p1150) target = $region36
        $region35: #{tpu_custom_call.1} parent=31 // pred_region
          %s1153 = smul.u32 2, %s22
          %s1155 = ssub.s32 256, 256
          %1156 = vsyncadd %s1146, %s1155
          %s1157 = smul.addr %s21, 2
          %s1158 = sadd.s32 %s1153, %s1157
          %s1159 = smul.addr %s1158, 128
          %s1160 = scalar_lea.hbm %s3, %s1159
          %s1162 = sshll.u32 %s1149, 4
          %s1163 = int_to_ptr.vmem [resolvable:$true] %s1162
          %1165 = dma.vmem_to_hbm [thread:$0]  %s1163, 256, %s1160, %s1146
        $region36: #{tpu_custom_call.1} parent=31 // pred_fallthru
          _
      $region32: #{tpu_custom_call.1} parent=5 // pred_fallthru
        _
      %p1166 = scmp.le.s32.totalorder 2, %s12
      // Predicated region
      $region37: #{tpu_custom_call.1} parent=5 // pred_check
        %p1167 = pneg %p1166
      $region38: #{tpu_custom_call.1} parent=5 // pred_check_branch
        %1169 = sbr.rel (%p1167) target = $region40
      $region39: #{tpu_custom_call.1} parent=5 // pred_region
        %s1170 = ssub.s32 %s12, 2
        // Predicated region
        $region41: #{tpu_custom_call.1} parent=39 // pred_check
          %p1171 = pneg %p125
        $region42: #{tpu_custom_call.1} parent=39 // pred_check_branch
          %1173 = sbr.rel (%p1171) target = $region44
        $region43: #{tpu_custom_call.1} parent=39 // pred_region
          %s1174 = sand.u32 %s110, 1
          %s1175 = scalar_lea.sflag [#allocation3], %s1174
          %s1176 = sand.u32 %s110, 1
          %s1177 = smul.addr %s1176, 16
          %s1178 = scalar_lea.vmem [#allocation2], %s1177
          %1179 = dma.done %s1175, 256
        $region44: #{tpu_custom_call.1} parent=39 // pred_fallthru
          _
      $region40: #{tpu_custom_call.1} parent=5 // pred_fallthru
        _
    $region6: #{tpu_custom_call.1} parent=1 // loop_footer
      %s16 = sadd.s32 1, %s12
    $region7: #{tpu_custom_call.1} parent=1 // loop_footer_branch
      %11 = sbr.rel target = $region3
    $region8: #{tpu_custom_call.1} parent=1 // loop_exit
      _
    %1180 = vsyncpa [#allocation3], 1
    %s1181 = scalar_lea.sflag [#allocation3], 1
    %1182 = vsyncpa %s1181, 1

</llo_original>
